<compile_context>
chip_gen: v7x
topology: tpu7x:2x2x1
jax: 0.10.0
libtpu: 0.0.40
codegen_flags: <defaults>
</compile_context>

<pallas_src>
import functools
import math

import jax
import jax.numpy as jnp
from jax import lax
from jax.experimental import pallas as pl
from jax.experimental.pallas import tpu as pltpu


def _value_net_kernel(x_ref, w1t_ref, b1t_ref, w2t_ref, b2t_ref, w3_ref, b3_ref,
                      o_ref, *, batch_major):
    """Computes one (1, tm) slab of V(s); activations are (H, tm) lane-dense."""
    w1t = w1t_ref[...]                                   # (H, n_in)
    if batch_major:
        # x block is the natural (tm, n_in) layout; contract the last dims of both
        # operands (flash-attention q.k^T pattern) -> no transpose materialised and
        # no wrapper-side relayout of the input slab.
        s1 = lax.dot_general(
            w1t, x_ref[...],
            dimension_numbers=(((1,), (1,)), ((), ())),
            preferred_element_type=jnp.float32,
        )                                                # (H, tm)
    else:
        # Fallback layout: x block already (n_in, tm).
        s1 = jnp.dot(w1t, x_ref[...], preferred_element_type=jnp.float32)
    h1 = jnp.tanh(s1 + b1t_ref[...])                     # (H, tm)
    h2 = jnp.tanh(
        jnp.dot(w2t_ref[...], h1, preferred_element_type=jnp.float32) + b2t_ref[...]
    )                                                    # (H, tm)
    # Final (H -> 1) layer on VPU + sublane reduce instead of a 1-wide MXU matmul.
    out = jnp.sum(h2 * w3_ref[...], axis=0, keepdims=True) + b3_ref[...]  # (1, tm)
    o_ref[...] = out.astype(o_ref.dtype)


def _round_up(x, m):
    return ((x + m - 1) // m) * m


def _pick_tile(M, tm):
    """Lane-dense row tile: multiple of 128, clamped to the batch, split so the grid
    has >= 2 steps when there is enough work (both TensorCores on v7x)."""
    tm_eff = max(128, (int(tm) // 128) * 128)
    m_ceil = _round_up(max(M, 1), 128)
    tm_eff = min(tm_eff, m_ceil)
    if m_ceil >= 256 and tm_eff >= m_ceil:
        tm_eff = _round_up((m_ceil + 1) // 2, 128)       # -> grid of (at least) 2
    return tm_eff


@functools.partial(jax.jit, static_argnames=("tm", "batch_major"))
def _value_net_forward_impl(states, params, *, tm, batch_major):
    w1, b1, w2, b2, w3, b3 = params
    lead = states.shape[:-1]
    n_in = states.shape[-1]
    H = w1.shape[1]
    M = int(math.prod(lead)) if lead else 1

    # Feature-on-sublane weights/biases (few KiB, resident in VMEM for the whole run).
    w1t, b1t, w2t, b2t = w1.T, b1.T, w2.T, b2.T          # (H,n_in) (H,1) (H,H) (H,1)

    tm_eff = _pick_tile(M, tm)
    grid = (pl.cdiv(M, tm_eff),)                         # partial last block is masked
    rep = lambda i: (0, 0)                               # weights: never re-DMA'd

    if batch_major:
        x = states.reshape(M, n_in)                      # free reshape, no pad/transpose
        x_spec = pl.BlockSpec((tm_eff, n_in), lambda i: (i, 0))
    else:
        x = states.reshape(M, n_in).T                    # fallback only: 1 extra HBM pass
        x_spec = pl.BlockSpec((n_in, tm_eff), lambda i: (0, i))

    weight_bytes = sum(int(a.size) * 4 for a in (w1, b1, w2, b2, w3, b3))
    cost = pl.CostEstimate(
        flops=2 * M * (n_in * H + H * H + H),
        transcendentals=2 * M * H,
        bytes_accessed=M * n_in * 4 + M * 4 + weight_bytes,
    )

    out = pl.pallas_call(
        functools.partial(_value_net_kernel, batch_major=batch_major),
        out_shape=jax.ShapeDtypeStruct((1, M), jnp.float32),
        grid_spec=pltpu.PrefetchScalarGridSpec(
            num_scalar_prefetch=0,
            grid=grid,
            in_specs=[
                x_spec,
                pl.BlockSpec((H, n_in), rep),
                pl.BlockSpec((H, 1), rep),
                pl.BlockSpec((H, H), rep),
                pl.BlockSpec((H, 1), rep),
                pl.BlockSpec((H, 1), rep),
                pl.BlockSpec((1, 1), rep),
            ],
            out_specs=pl.BlockSpec((1, tm_eff), lambda i: (0, i)),
        ),
        compiler_params=pltpu.CompilerParams(
            dimension_semantics=("parallel",),
            vmem_limit_bytes=32 * 1024 * 1024,
        ),
        cost_estimate=cost,
    )(x, w1t, b1t, w2t, b2t, w3, b3)

    return out.reshape(*lead, 1)


_FIRST_LAYER_MODE = {"batch_major": None}


def value_net_forward(states, params, *, tm=8192):
    """Fused MLP V(s) forward. states: (..., n_inputs) -> (..., 1)."""
    if _FIRST_LAYER_MODE["batch_major"] is None:
        try:
            out = jax.block_until_ready(
                _value_net_forward_impl(states, params, tm=tm, batch_major=True))
            _FIRST_LAYER_MODE["batch_major"] = True
            return out
        except Exception:
            # Older Mosaic without transposed-RHS matmul support: fall back once to the
            # previously-validated pre-transposed (n_in, M) input layout.
            _FIRST_LAYER_MODE["batch_major"] = False
    return _value_net_forward_impl(
        states, params, tm=tm, batch_major=_FIRST_LAYER_MODE["batch_major"])


def init_value_net_params(key, n_inputs, hidden):
    """Deterministic init mimicking torch.nn.Linear (uniform(-1/sqrt(fan_in), +))."""
    ks = jax.random.split(key, 6)

    def linear(kw, kb, fan_in, fan_out):
        bound = 1.0 / jnp.sqrt(fan_in)
        w = jax.random.uniform(kw, (fan_in, fan_out), jnp.float32, -bound, bound)
        b = jax.random.uniform(kb, (1, fan_out), jnp.float32, -bound, bound)
        return w, b

    w1, b1 = linear(ks[0], ks[1], n_inputs, hidden)
    w2, b2 = linear(ks[2], ks[3], hidden, hidden)
    w3, b3 = linear(ks[4], ks[5], hidden, 1)
    return (w1, b1, w2, b2, w3, b3)


def _reference_forward(states, params):
    w1, b1, w2, b2, w3, b3 = params
    h1 = jnp.tanh(states @ w1 + b1)
    h2 = jnp.tanh(h1 @ w2 + b2)
    return h2 @ w3 + b3


if __name__ == "__main__":
    # Small shapes consistent with ValueNet: trajectories of state vectors.
    N, T, n_inputs, hidden = 2, 8, 8, 32

    key = jax.random.PRNGKey(0)
    k_params, k_states, k_big = jax.random.split(key, 3)

    params = init_value_net_params(k_params, n_inputs, hidden)
    states = jax.random.normal(k_states, (N, T, n_inputs), dtype=jnp.float32)

    # (N, T, n_inputs) path
    values = jax.block_until_ready(value_net_forward(states, params))
    ref = _reference_forward(states, params)
    assert values.shape == (N, T, 1)
    assert jnp.allclose(values, ref, atol=1e-5, rtol=1e-5)

    # (N, n_inputs) path (module also accepts un-batched trajectories)
    flat_states = states.reshape(N * T, n_inputs)
    flat_values = jax.block_until_ready(value_net_forward(flat_states, params))
    assert flat_values.shape == (N * T, 1)
    assert jnp.allclose(flat_values, _reference_forward(flat_states, params),
                        atol=1e-5, rtol=1e-5)

    # Multi-step grid + partial (masked) final block: M = 300, tm = 128 -> grid of 3.
    big_states = jax.random.normal(k_big, (4, 75, n_inputs), dtype=jnp.float32)
    big_values = jax.block_until_ready(value_net_forward(big_states, params, tm=128))
    assert big_values.shape == (4, 75, 1)
    assert jnp.allclose(big_values, _reference_forward(big_states, params),
                        atol=1e-5, rtol=1e-5)

    print("KERNEL_OK")
</pallas_src>

<mosaic_0001>
module attributes {stable_mosaic.version = 11 : i64} {
  func.func @_value_net_kernel(%arg0: i32, %arg1: memref<128x8xf32, #tpu.memory_space<vmem>>, %arg2: memref<32x8xf32, #tpu.memory_space<vmem>>, %arg3: memref<32x1xf32, #tpu.memory_space<vmem>>, %arg4: memref<32x32xf32, #tpu.memory_space<vmem>>, %arg5: memref<32x1xf32, #tpu.memory_space<vmem>>, %arg6: memref<32x1xf32, #tpu.memory_space<vmem>>, %arg7: memref<1x1xf32, #tpu.memory_space<vmem>>, %arg8: memref<1x128xf32, #tpu.memory_space<vmem>>) attributes {dimension_semantics = [#tpu.dimension_semantics<parallel>], iteration_bounds = array<i64: 1>, scalar_prefetch = 0 : i64, scratch_operands = 0 : i64, tpu.core_type = #tpu.core_type<tc>, window_params = [{transform_indices = @transform_0, window_bounds = array<i64: 128, 8>}, {pipeline_mode = #tpu.pipeline_mode<synchronous>, transform_indices = @transform_1, window_bounds = array<i64: 32, 8>}, {pipeline_mode = #tpu.pipeline_mode<synchronous>, transform_indices = @transform_2, window_bounds = array<i64: 32, 1>}, {pipeline_mode = #tpu.pipeline_mode<synchronous>, transform_indices = @transform_3, window_bounds = array<i64: 32, 32>}, {pipeline_mode = #tpu.pipeline_mode<synchronous>, transform_indices = @transform_4, window_bounds = array<i64: 32, 1>}, {pipeline_mode = #tpu.pipeline_mode<synchronous>, transform_indices = @transform_5, window_bounds = array<i64: 32, 1>}, {pipeline_mode = #tpu.pipeline_mode<synchronous>, transform_indices = @transform_6, window_bounds = array<i64: 1, 1>}, {transform_indices = @transform_7, window_bounds = array<i64: 1, 128>}]} {
    %c0 = arith.constant 0 : index
    %c0_0 = arith.constant 0 : index
    %0 = vector.load %arg2[%c0, %c0_0] : memref<32x8xf32, #tpu.memory_space<vmem>>, vector<32x8xf32>
    %c0_1 = arith.constant 0 : index
    %c0_2 = arith.constant 0 : index
    %1 = vector.load %arg1[%c0_1, %c0_2] : memref<128x8xf32, #tpu.memory_space<vmem>>, vector<128x8xf32>
    %cst = arith.constant dense<0.000000e+00> : vector<32x128xf32>
    %2 = tpu.matmul %0, %1, %cst {dimension_numbers = #tpu.dot_dimension_numbers<[1], [1], [0], [0], [0, 0, 1, 0], [], []>} : vector<32x8xf32>, vector<128x8xf32>, vector<32x128xf32> -> vector<32x128xf32>
    %c0_3 = arith.constant 0 : index
    %c0_4 = arith.constant 0 : index
    %3 = vector.load %arg3[%c0_3, %c0_4] : memref<32x1xf32, #tpu.memory_space<vmem>>, vector<32x1xf32>
    %4 = vector.broadcast %3 : vector<32x1xf32> to vector<32x128xf32>
    %5 = arith.addf %2, %4 : vector<32x128xf32>
    %6 = math.tanh %5 : vector<32x128xf32>
    %c0_5 = arith.constant 0 : index
    %c0_6 = arith.constant 0 : index
    %7 = vector.load %arg4[%c0_5, %c0_6] : memref<32x32xf32, #tpu.memory_space<vmem>>, vector<32x32xf32>
    %cst_7 = arith.constant dense<0.000000e+00> : vector<32x128xf32>
    %8 = tpu.matmul %7, %6, %cst_7 {dimension_numbers = #tpu.dot_dimension_numbers<[1], [0], [0], [1], [0, 0, 1, 1], [], []>} : vector<32x32xf32>, vector<32x128xf32>, vector<32x128xf32> -> vector<32x128xf32>
    %c0_8 = arith.constant 0 : index
    %c0_9 = arith.constant 0 : index
    %9 = vector.load %arg5[%c0_8, %c0_9] : memref<32x1xf32, #tpu.memory_space<vmem>>, vector<32x1xf32>
    %10 = vector.broadcast %9 : vector<32x1xf32> to vector<32x128xf32>
    %11 = arith.addf %8, %10 : vector<32x128xf32>
    %12 = math.tanh %11 : vector<32x128xf32>
    %c0_10 = arith.constant 0 : index
    %c0_11 = arith.constant 0 : index
    %13 = vector.load %arg6[%c0_10, %c0_11] : memref<32x1xf32, #tpu.memory_space<vmem>>, vector<32x1xf32>
    %14 = vector.broadcast %13 : vector<32x1xf32> to vector<32x128xf32>
    %15 = arith.mulf %12, %14 : vector<32x128xf32>
    %cst_12 = arith.constant dense<0.000000e+00> : vector<128xf32>
    %16 = vector.multi_reduction <add>, %15, %cst_12 [0] : vector<32x128xf32> to vector<128xf32>
    %17 = vector.shape_cast %16 : vector<128xf32> to vector<1x128xf32>
    %c0_13 = arith.constant 0 : index
    %c0_14 = arith.constant 0 : index
    %18 = vector.load %arg7[%c0_13, %c0_14] : memref<1x1xf32, #tpu.memory_space<vmem>>, vector<1x1xf32>
    %19 = vector.broadcast %18 : vector<1x1xf32> to vector<1x128xf32>
    %20 = arith.addf %17, %19 : vector<1x128xf32>
    %c0_15 = arith.constant 0 : index
    %c0_16 = arith.constant 0 : index
    %21 = vector.load %arg8[%c0_15, %c0_16] : memref<1x128xf32, #tpu.memory_space<vmem>>, vector<1x128xf32>
    tpu.vector_store %arg8[%c0_15, %c0_16], %20 {strides = array<i32>} : memref<1x128xf32, #tpu.memory_space<vmem>>, vector<1x128xf32>,
    return
  }
  func.func @transform_0(%arg0: i32) -> (i32, i32) {
    %c0_i32 = arith.constant 0 : i32
    %c0_i32_0 = arith.constant 0 : i32
    return %arg0, %c0_i32 : i32, i32
  }
  func.func @transform_1(%arg0: i32) -> (i32, i32) {
    %c0_i32 = arith.constant 0 : i32
    %c0_i32_0 = arith.constant 0 : i32
    %c0_i32_1 = arith.constant 0 : i32
    return %c0_i32, %c0_i32_0 : i32, i32
  }
  func.func @transform_2(%arg0: i32) -> (i32, i32) {
    %c0_i32 = arith.constant 0 : i32
    %c0_i32_0 = arith.constant 0 : i32
    %c0_i32_1 = arith.constant 0 : i32
    return %c0_i32, %c0_i32_0 : i32, i32
  }
  func.func @transform_3(%arg0: i32) -> (i32, i32) {
    %c0_i32 = arith.constant 0 : i32
    %c0_i32_0 = arith.constant 0 : i32
    %c0_i32_1 = arith.constant 0 : i32
    return %c0_i32, %c0_i32_0 : i32, i32
  }
  func.func @transform_4(%arg0: i32) -> (i32, i32) {
    %c0_i32 = arith.constant 0 : i32
    %c0_i32_0 = arith.constant 0 : i32
    %c0_i32_1 = arith.constant 0 : i32
    return %c0_i32, %c0_i32_0 : i32, i32
  }
  func.func @transform_5(%arg0: i32) -> (i32, i32) {
    %c0_i32 = arith.constant 0 : i32
    %c0_i32_0 = arith.constant 0 : i32
    %c0_i32_1 = arith.constant 0 : i32
    return %c0_i32, %c0_i32_0 : i32, i32
  }
  func.func @transform_6(%arg0: i32) -> (i32, i32) {
    %c0_i32 = arith.constant 0 : i32
    %c0_i32_0 = arith.constant 0 : i32
    %c0_i32_1 = arith.constant 0 : i32
    return %c0_i32, %c0_i32_0 : i32, i32
  }
  func.func @transform_7(%arg0: i32) -> (i32, i32) {
    %c0_i32 = arith.constant 0 : i32
    %c0_i32_0 = arith.constant 0 : i32
    return %c0_i32, %arg0 : i32, i32
  }
}

module attributes {stable_mosaic.version = 11 : i64} {
  func.func @_value_net_kernel(%arg0: i32, %arg1: memref<8x128xf32, #tpu.memory_space<vmem>>, %arg2: memref<32x8xf32, #tpu.memory_space<vmem>>, %arg3: memref<32x1xf32, #tpu.memory_space<vmem>>, %arg4: memref<32x32xf32, #tpu.memory_space<vmem>>, %arg5: memref<32x1xf32, #tpu.memory_space<vmem>>, %arg6: memref<32x1xf32, #tpu.memory_space<vmem>>, %arg7: memref<1x1xf32, #tpu.memory_space<vmem>>, %arg8: memref<1x128xf32, #tpu.memory_space<vmem>>) attributes {dimension_semantics = [#tpu.dimension_semantics<parallel>], iteration_bounds = array<i64: 1>, scalar_prefetch = 0 : i64, scratch_operands = 0 : i64, tpu.core_type = #tpu.core_type<tc>, window_params = [{transform_indices = @transform_0, window_bounds = array<i64: 8, 128>}, {pipeline_mode = #tpu.pipeline_mode<synchronous>, transform_indices = @transform_1, window_bounds = array<i64: 32, 8>}, {pipeline_mode = #tpu.pipeline_mode<synchronous>, transform_indices = @transform_2, window_bounds = array<i64: 32, 1>}, {pipeline_mode = #tpu.pipeline_mode<synchronous>, transform_indices = @transform_3, window_bounds = array<i64: 32, 32>}, {pipeline_mode = #tpu.pipeline_mode<synchronous>, transform_indices = @transform_4, window_bounds = array<i64: 32, 1>}, {pipeline_mode = #tpu.pipeline_mode<synchronous>, transform_indices = @transform_5, window_bounds = array<i64: 32, 1>}, {pipeline_mode = #tpu.pipeline_mode<synchronous>, transform_indices = @transform_6, window_bounds = array<i64: 1, 1>}, {transform_indices = @transform_7, window_bounds = array<i64: 1, 128>}]} {
    %c0 = arith.constant 0 : index
    %c0_0 = arith.constant 0 : index
    %0 = vector.load %arg2[%c0, %c0_0] : memref<32x8xf32, #tpu.memory_space<vmem>>, vector<32x8xf32>
    %c0_1 = arith.constant 0 : index
    %c0_2 = arith.constant 0 : index
    %1 = vector.load %arg1[%c0_1, %c0_2] : memref<8x128xf32, #tpu.memory_space<vmem>>, vector<8x128xf32>
    %cst = arith.constant dense<0.000000e+00> : vector<32x128xf32>
    %2 = tpu.matmul %0, %1, %cst {dimension_numbers = #tpu.dot_dimension_numbers<[1], [0], [0], [1], [0, 0, 1, 1], [], []>} : vector<32x8xf32>, vector<8x128xf32>, vector<32x128xf32> -> vector<32x128xf32>
    %c0_3 = arith.constant 0 : index
    %c0_4 = arith.constant 0 : index
    %3 = vector.load %arg3[%c0_3, %c0_4] : memref<32x1xf32, #tpu.memory_space<vmem>>, vector<32x1xf32>
    %4 = vector.broadcast %3 : vector<32x1xf32> to vector<32x128xf32>
    %5 = arith.addf %2, %4 : vector<32x128xf32>
    %6 = math.tanh %5 : vector<32x128xf32>
    %c0_5 = arith.constant 0 : index
    %c0_6 = arith.constant 0 : index
    %7 = vector.load %arg4[%c0_5, %c0_6] : memref<32x32xf32, #tpu.memory_space<vmem>>, vector<32x32xf32>
    %cst_7 = arith.constant dense<0.000000e+00> : vector<32x128xf32>
    %8 = tpu.matmul %7, %6, %cst_7 {dimension_numbers = #tpu.dot_dimension_numbers<[1], [0], [0], [1], [0, 0, 1, 1], [], []>} : vector<32x32xf32>, vector<32x128xf32>, vector<32x128xf32> -> vector<32x128xf32>
    %c0_8 = arith.constant 0 : index
    %c0_9 = arith.constant 0 : index
    %9 = vector.load %arg5[%c0_8, %c0_9] : memref<32x1xf32, #tpu.memory_space<vmem>>, vector<32x1xf32>
    %10 = vector.broadcast %9 : vector<32x1xf32> to vector<32x128xf32>
    %11 = arith.addf %8, %10 : vector<32x128xf32>
    %12 = math.tanh %11 : vector<32x128xf32>
    %c0_10 = arith.constant 0 : index
    %c0_11 = arith.constant 0 : index
    %13 = vector.load %arg6[%c0_10, %c0_11] : memref<32x1xf32, #tpu.memory_space<vmem>>, vector<32x1xf32>
    %14 = vector.broadcast %13 : vector<32x1xf32> to vector<32x128xf32>
    %15 = arith.mulf %12, %14 : vector<32x128xf32>
    %cst_12 = arith.constant dense<0.000000e+00> : vector<128xf32>
    %16 = vector.multi_reduction <add>, %15, %cst_12 [0] : vector<32x128xf32> to vector<128xf32>
    %17 = vector.shape_cast %16 : vector<128xf32> to vector<1x128xf32>
    %c0_13 = arith.constant 0 : index
    %c0_14 = arith.constant 0 : index
    %18 = vector.load %arg7[%c0_13, %c0_14] : memref<1x1xf32, #tpu.memory_space<vmem>>, vector<1x1xf32>
    %19 = vector.broadcast %18 : vector<1x1xf32> to vector<1x128xf32>
    %20 = arith.addf %17, %19 : vector<1x128xf32>
    %c0_15 = arith.constant 0 : index
    %c0_16 = arith.constant 0 : index
    %21 = vector.load %arg8[%c0_15, %c0_16] : memref<1x128xf32, #tpu.memory_space<vmem>>, vector<1x128xf32>
    tpu.vector_store %arg8[%c0_15, %c0_16], %20 {strides = array<i32>} : memref<1x128xf32, #tpu.memory_space<vmem>>, vector<1x128xf32>,
    return
  }
  func.func @transform_0(%arg0: i32) -> (i32, i32) {
    %c0_i32 = arith.constant 0 : i32
    %c0_i32_0 = arith.constant 0 : i32
    return %c0_i32, %arg0 : i32, i32
  }
  func.func @transform_1(%arg0: i32) -> (i32, i32) {
    %c0_i32 = arith.constant 0 : i32
    %c0_i32_0 = arith.constant 0 : i32
    %c0_i32_1 = arith.constant 0 : i32
    return %c0_i32, %c0_i32_0 : i32, i32
  }
  func.func @transform_2(%arg0: i32) -> (i32, i32) {
    %c0_i32 = arith.constant 0 : i32
    %c0_i32_0 = arith.constant 0 : i32
    %c0_i32_1 = arith.constant 0 : i32
    return %c0_i32, %c0_i32_0 : i32, i32
  }
  func.func @transform_3(%arg0: i32) -> (i32, i32) {
    %c0_i32 = arith.constant 0 : i32
    %c0_i32_0 = arith.constant 0 : i32
    %c0_i32_1 = arith.constant 0 : i32
    return %c0_i32, %c0_i32_0 : i32, i32
  }
  func.func @transform_4(%arg0: i32) -> (i32, i32) {
    %c0_i32 = arith.constant 0 : i32
    %c0_i32_0 = arith.constant 0 : i32
    %c0_i32_1 = arith.constant 0 : i32
    return %c0_i32, %c0_i32_0 : i32, i32
  }
  func.func @transform_5(%arg0: i32) -> (i32, i32) {
    %c0_i32 = arith.constant 0 : i32
    %c0_i32_0 = arith.constant 0 : i32
    %c0_i32_1 = arith.constant 0 : i32
    return %c0_i32, %c0_i32_0 : i32, i32
  }
  func.func @transform_6(%arg0: i32) -> (i32, i32) {
    %c0_i32 = arith.constant 0 : i32
    %c0_i32_0 = arith.constant 0 : i32
    %c0_i32_1 = arith.constant 0 : i32
    return %c0_i32, %c0_i32_0 : i32, i32
  }
  func.func @transform_7(%arg0: i32) -> (i32, i32) {
    %c0_i32 = arith.constant 0 : i32
    %c0_i32_0 = arith.constant 0 : i32
    return %c0_i32, %arg0 : i32, i32
  }
}

</mosaic_0001>

<llo_original>
// kernel: _value_net_forward_impl.1
$region0: #{_value_net_forward_impl.1}
  #allocation0 [shape = 'u32[]', space=smem, size = 0x4, offset = 0x4, fixed_abs, tag = 'smem constant byte address 0x4 - core index']
  #allocation1 [shape = 'u32[144,128]{1,0:T(1,128)}', space=vmem, size = 0x12000, scoped, tag = 'internal scratch']
  #allocation2 [shape = 'f32[1,1]{1,0:T(1,128)S(1)}', space=vmem, size = 0x200, scoped, tag = 'scoped memory for _value_net_forward_impl.1']
  %s0 = inlined_call_operand.vmem [shape: f32[16,8], index: 0, kind: input, shape index: {}]
  %s1 = inlined_call_operand.vmem [shape: f32[32,8], index: 1, kind: input, shape index: {}]
  %s2 = inlined_call_operand.vmem [shape: f32[32,1], index: 2, kind: input, shape index: {}]
  %s3 = inlined_call_operand.vmem [shape: f32[32,32], index: 3, kind: input, shape index: {}]
  %s4 = inlined_call_operand.vmem [shape: f32[32,1], index: 4, kind: input, shape index: {}]
  %s5 = inlined_call_operand.vmem [shape: f32[32,1], index: 5, kind: input, shape index: {}]
  %s6 = inlined_call_operand.<no memory space> [shape: f32[1,1], index: 6, kind: input, shape index: {}]
  %s7 = inlined_call_operand.vmem [shape: f32[1,16], index: 7, kind: output, shape index: {}]
  %s8 = sld [smem:[#allocation0]]
  $region38: #{_value_net_forward_impl.1} parent=0
    _
  %s10 = ssub.s32 1, %s8
  %s11 = scalar_select 0, %s10, %s8
  %v12 = vstv %s6
  %13 = vst [vmem:[#allocation2] sm:$0x1] %v12
  // Predicated region
  $region2: #{_value_net_forward_impl.1} parent=0 // pred_check
    _
  $region3: #{_value_net_forward_impl.1} parent=0 // pred_check_branch
    %15 = sbr.rel (0) target = $region5
  $region4: #{_value_net_forward_impl.1} parent=0 // pred_region
    _
  $region5: #{_value_net_forward_impl.1} parent=0 // pred_fallthru
    _
  // Predicated region
  $region6: #{_value_net_forward_impl.1} parent=0 // pred_check
    _
  $region7: #{_value_net_forward_impl.1} parent=0 // pred_check_branch
    %17 = sbr.rel (0) target = $region9
  $region8: #{_value_net_forward_impl.1} parent=0 // pred_region
    _
  $region9: #{_value_net_forward_impl.1} parent=0 // pred_fallthru
    _
  // Predicated region
  $region10: #{_value_net_forward_impl.1} parent=0 // pred_check
    _
  $region11: #{_value_net_forward_impl.1} parent=0 // pred_check_branch
    %19 = sbr.rel (0) target = $region13
  $region12: #{_value_net_forward_impl.1} parent=0 // pred_region
    _
  $region13: #{_value_net_forward_impl.1} parent=0 // pred_fallthru
    _
  // Predicated region
  $region14: #{_value_net_forward_impl.1} parent=0 // pred_check
    _
  $region15: #{_value_net_forward_impl.1} parent=0 // pred_check_branch
    %21 = sbr.rel (0) target = $region17
  $region16: #{_value_net_forward_impl.1} parent=0 // pred_region
    _
  $region17: #{_value_net_forward_impl.1} parent=0 // pred_fallthru
    _
  // Predicated region
  $region18: #{_value_net_forward_impl.1} parent=0 // pred_check
    _
  $region19: #{_value_net_forward_impl.1} parent=0 // pred_check_branch
    %23 = sbr.rel (0) target = $region21
  $region20: #{_value_net_forward_impl.1} parent=0 // pred_region
    _
  $region21: #{_value_net_forward_impl.1} parent=0 // pred_fallthru
    _
  // Predicated region
  $region22: #{_value_net_forward_impl.1} parent=0 // pred_check
    _
  $region23: #{_value_net_forward_impl.1} parent=0 // pred_check_branch
    %25 = sbr.rel (0) target = $region25
  $region24: #{_value_net_forward_impl.1} parent=0 // pred_region
    _
  $region25: #{_value_net_forward_impl.1} parent=0 // pred_fallthru
    _
  // Predicated region
  $region26: #{_value_net_forward_impl.1} parent=0 // pred_check
    _
  $region27: #{_value_net_forward_impl.1} parent=0 // pred_check_branch
    %27 = sbr.rel (0) target = $region29
  $region28: #{_value_net_forward_impl.1} parent=0 // pred_region
    _
  $region29: #{_value_net_forward_impl.1} parent=0 // pred_fallthru
    _
  %v28 = vld [vmem:[%s1] sm:$0xff]
  %v29 = vld [vmem:[%s1 + $0x8] sm:$0xff]
  %v30 = vld [vmem:[%s1 + $0x10] sm:$0xff]
  %v31 = vld [vmem:[%s1 + $0x18] sm:$0xff]
  %v32 = vld [vmem:[%s0] sm:$0xff]
  %v33 = vld [vmem:[%s0 + $0x8] sm:$0xff]
  %v34 = vld [vmem:[%s0 + $0x10] sm:$0xff]
  %v35 = vld [vmem:[%s0 + $0x18] sm:$0xff]
  %v36 = vld [vmem:[%s0 + $0x20] sm:$0xff]
  %v37 = vld [vmem:[%s0 + $0x28] sm:$0xff]
  %v38 = vld [vmem:[%s0 + $0x30] sm:$0xff]
  %v39 = vld [vmem:[%s0 + $0x38] sm:$0xff]
  %v40 = vld [vmem:[%s0 + $0x40] sm:$0xff]
  %v41 = vld [vmem:[%s0 + $0x48] sm:$0xff]
  %v42 = vld [vmem:[%s0 + $0x50] sm:$0xff]
  %v43 = vld [vmem:[%s0 + $0x58] sm:$0xff]
  %v44 = vld [vmem:[%s0 + $0x60] sm:$0xff]
  %v45 = vld [vmem:[%s0 + $0x68] sm:$0xff]
  %v46 = vld [vmem:[%s0 + $0x70] sm:$0xff]
  %v47 = vld [vmem:[%s0 + $0x78] sm:$0xff]
  %v48 = vld [vmem:[%s2] sm:$0xff]
  %v49 = vld [vmem:[%s2 + $0x8] sm:$0xff]
  %v50 = vld [vmem:[%s2 + $0x10] sm:$0xff]
  %v51 = vld [vmem:[%s2 + $0x18] sm:$0xff]
  %53 = vset.pattern.permute.xlu0 0
  %54 = vperm.xlu0 %53, %v48
  %v55 = vpop.permute.xlu0 %54
  %58 = vset.pattern.permute.xlu0 0
  %59 = vperm.xlu0 %58, %v49
  %v60 = vpop.permute.xlu0 %59
  %63 = vset.pattern.permute.xlu0 0
  %64 = vperm.xlu0 %63, %v50
  %v65 = vpop.permute.xlu0 %64
  %68 = vset.pattern.permute.xlu0 0
  %69 = vperm.xlu0 %68, %v51
  %v70 = vpop.permute.xlu0 %69
  %vm72 = vcmask 64512
  %v74 = vsel %vm72, %v28, 0
  %v77 = vsel %vm72, %v29, 0
  %v80 = vsel %vm72, %v30, 0
  %v83 = vsel %vm72, %v31, 0
  %v86 = vsel %vm72, %v32, 0
  %v89 = vsel %vm72, %v33, 0
  %v92 = vsel %vm72, %v34, 0
  %v95 = vsel %vm72, %v35, 0
  %v98 = vsel %vm72, %v36, 0
  %v101 = vsel %vm72, %v37, 0
  %v104 = vsel %vm72, %v38, 0
  %v107 = vsel %vm72, %v39, 0
  %v110 = vsel %vm72, %v40, 0
  %v113 = vsel %vm72, %v41, 0
  %v116 = vsel %vm72, %v42, 0
  %v119 = vsel %vm72, %v43, 0
  %v122 = vsel %vm72, %v44, 0
  %v125 = vsel %vm72, %v45, 0
  %v128 = vsel %vm72, %v46, 0
  %v131 = vsel %vm72, %v47, 0
  %133 = vmatprep.subr.mxu0 0.0
  %134 = vmatpush1.xpose.msra.mxu0 %v86
  %135 = vmatprep.subr.mxu0 0.0
  %136 = vmatpush1.xpose.msra.mxu0 %v89
  %137 = vmatprep.subr.mxu0 0.0
  %138 = vmatpush1.xpose.msra.mxu0 %v92
  %139 = vmatprep.subr.mxu0 0.0
  %140 = vmatpush1.xpose.msra.mxu0 %v95
  %141 = vmatprep.subr.mxu0 0.0
  %142 = vmatpush1.xpose.msra.mxu0 %v98
  %143 = vmatprep.subr.mxu0 0.0
  %144 = vmatpush1.xpose.msra.mxu0 %v101
  %145 = vmatprep.subr.mxu0 0.0
  %146 = vmatpush1.xpose.msra.mxu0 %v104
  %147 = vmatprep.subr.mxu0 0.0
  %148 = vmatpush1.xpose.msra.mxu0 %v107
  %149 = vmatprep.subr.mxu0 0.0
  %150 = vmatpush1.xpose.msra.mxu0 %v110
  %151 = vmatprep.subr.mxu0 0.0
  %152 = vmatpush1.xpose.msra.mxu0 %v113
  %153 = vmatprep.subr.mxu0 0.0
  %154 = vmatpush1.xpose.msra.mxu0 %v116
  %155 = vmatprep.subr.mxu0 0.0
  %156 = vmatpush1.xpose.msra.mxu0 %v119
  %157 = vmatprep.subr.mxu0 0.0
  %158 = vmatpush1.xpose.msra.mxu0 %v122
  %159 = vmatprep.subr.mxu0 0.0
  %160 = vmatpush1.xpose.msra.mxu0 %v125
  %161 = vmatprep.subr.mxu0 0.0
  %162 = vmatpush1.xpose.msra.mxu0 %v128
  %163 = vmatprep.subr.mxu0 0.0
  %164 = vmatpush1.xpose.msra.mxu0 %v131
  %165 = vmatprep.subr.mxu0 0.0
  %166 = vmatpush1.xpose.msra.mxu0 0.0
  %167 = vmatprep.subr.mxu0 0.0
  %168 = vmatpush1.xpose.msra.mxu0 0.0
  %169 = vmatprep.subr.mxu0 0.0
  %170 = vmatpush1.xpose.msra.mxu0 0.0
  %171 = vmatprep.subr.mxu0 0.0
  %172 = vmatpush1.xpose.msra.mxu0 0.0
  %173 = vmatprep.subr.mxu0 0.0
  %174 = vmatpush1.xpose.msra.mxu0 0.0
  %175 = vmatprep.subr.mxu0 0.0
  %176 = vmatpush1.xpose.msra.mxu0 0.0
  %177 = vmatprep.subr.mxu0 0.0
  %178 = vmatpush1.xpose.msra.mxu0 0.0
  %179 = vmatprep.subr.mxu0 0.0
  %180 = vmatpush1.xpose.msra.mxu0 0.0
  %181 = vmatprep.subr.mxu0 0.0
  %182 = vmatpush1.xpose.msra.mxu0 0.0
  %183 = vmatprep.subr.mxu0 0.0
  %184 = vmatpush1.xpose.msra.mxu0 0.0
  %185 = vmatprep.subr.mxu0 0.0
  %186 = vmatpush1.xpose.msra.mxu0 0.0
  %187 = vmatprep.subr.mxu0 0.0
  %188 = vmatpush1.xpose.msra.mxu0 0.0
  %189 = vmatprep.subr.mxu0 0.0
  %190 = vmatpush1.xpose.msra.mxu0 0.0
  %191 = vmatprep.subr.mxu0 0.0
  %192 = vmatpush1.xpose.msra.mxu0 0.0
  %193 = vmatprep.subr.mxu0 0.0
  %194 = vmatpush1.xpose.msra.mxu0 0.0
  %195 = vmatprep.subr.mxu0 0.0
  %196 = vmatpush1.xpose.msra.mxu0 0.0
  %197 = vmatprep.mubr.f32.mxu0 0.0
  %198 = vmatmul.mubr.f32.gmra.mrb[0].mxu0 %v74
  %v199 = vpop.f32.mrb[0].mxu0
  %v200 = vadd.f32 %v55, %v199
  %v201 = vpop.f32.mrb[0].mxu0
  %202 = vmatprep.mubr.f32.mxu0 0.0
  %203 = vmatmul.mubr.f32.gmra.mrb[0].mxu0 %v77
  %v204 = vpop.f32.mrb[0].mxu0
  %v205 = vadd.f32 %v60, %v204
  %v206 = vpop.f32.mrb[0].mxu0
  %207 = vmatprep.mubr.f32.mxu0 0.0
  %208 = vmatmul.mubr.f32.gmra.mrb[0].mxu0 %v80
  %v209 = vpop.f32.mrb[0].mxu0
  %v210 = vadd.f32 %v65, %v209
  %v211 = vpop.f32.mrb[0].mxu0
  %212 = vmatprep.mubr.f32.mxu0 0.0
  %213 = vmatmul.mubr.f32.gmra.mrb[0].mxu0 %v83
  %v214 = vpop.f32.mrb[0].mxu0
  %v215 = vadd.f32 %v70, %v214
  %v216 = vpop.f32.mrb[0].mxu0
  %217 = vdwg.mxu0
  %v218 = vtanh.pop %v200
  %v219 = vtanh.pop %v205
  %v220 = vtanh.pop %v210
  %v221 = vtanh.pop %v215
  %v222 = vld [vmem:[%s3] sm:$0xff]
  %v223 = vld [vmem:[%s3 + $0x8] sm:$0xff]
  %v224 = vld [vmem:[%s3 + $0x10] sm:$0xff]
  %v225 = vld [vmem:[%s3 + $0x18] sm:$0xff]
  %v226 = vld [vmem:[%s4] sm:$0xff]
  %v227 = vld [vmem:[%s4 + $0x8] sm:$0xff]
  %v228 = vld [vmem:[%s4 + $0x10] sm:$0xff]
  %v229 = vld [vmem:[%s4 + $0x18] sm:$0xff]
  %231 = vset.pattern.permute.xlu0 0
  %232 = vperm.xlu0 %231, %v226
  %v233 = vpop.permute.xlu0 %232
  %236 = vset.pattern.permute.xlu0 0
  %237 = vperm.xlu0 %236, %v227
  %v238 = vpop.permute.xlu0 %237
  %241 = vset.pattern.permute.xlu0 0
  %242 = vperm.xlu0 %241, %v228
  %v243 = vpop.permute.xlu0 %242
  %246 = vset.pattern.permute.xlu0 0
  %247 = vperm.xlu0 %246, %v229
  %v248 = vpop.permute.xlu0 %247
  %vm250 = vcmask 261120
  %v252 = vsel %vm250, %v222, 0
  %v255 = vsel %vm250, %v223, 0
  %v258 = vsel %vm250, %v224, 0
  %v261 = vsel %vm250, %v225, 0
  %263 = vmatprep.subr.mxu0 0.0
  %264 = vmatpush1.msra.mxu0 %v218
  %265 = vmatprep.subr.mxu0 0.0
  %266 = vmatpush1.msra.mxu0 %v219
  %267 = vmatprep.subr.mxu0 0.0
  %268 = vmatpush1.msra.mxu0 %v220
  %269 = vmatprep.subr.mxu0 0.0
  %270 = vmatpush1.msra.mxu0 %v221
  %271 = vmatprep.subr.mxu0 0.0
  %272 = vmatpush1.msra.mxu0 0.0
  %273 = vmatprep.subr.mxu0 0.0
  %274 = vmatpush1.msra.mxu0 0.0
  %275 = vmatprep.subr.mxu0 0.0
  %276 = vmatpush1.msra.mxu0 0.0
  %277 = vmatprep.subr.mxu0 0.0
  %278 = vmatpush1.msra.mxu0 0.0
  %279 = vmatprep.subr.mxu0 0.0
  %280 = vmatpush1.msra.mxu0 0.0
  %281 = vmatprep.subr.mxu0 0.0
  %282 = vmatpush1.msra.mxu0 0.0
  %283 = vmatprep.subr.mxu0 0.0
  %284 = vmatpush1.msra.mxu0 0.0
  %285 = vmatprep.subr.mxu0 0.0
  %286 = vmatpush1.msra.mxu0 0.0
  %287 = vmatprep.subr.mxu0 0.0
  %288 = vmatpush1.msra.mxu0 0.0
  %289 = vmatprep.subr.mxu0 0.0
  %290 = vmatpush1.msra.mxu0 0.0
  %291 = vmatprep.subr.mxu0 0.0
  %292 = vmatpush1.msra.mxu0 0.0
  %293 = vmatprep.subr.mxu0 0.0
  %294 = vmatpush1.msra.mxu0 0.0
  %295 = vmatprep.subr.mxu0 0.0
  %296 = vmatpush1.msra.mxu0 0.0
  %297 = vmatprep.subr.mxu0 0.0
  %298 = vmatpush1.msra.mxu0 0.0
  %299 = vmatprep.subr.mxu0 0.0
  %300 = vmatpush1.msra.mxu0 0.0
  %301 = vmatprep.subr.mxu0 0.0
  %302 = vmatpush1.msra.mxu0 0.0
  %303 = vmatprep.subr.mxu0 0.0
  %304 = vmatpush1.msra.mxu0 0.0
  %305 = vmatprep.subr.mxu0 0.0
  %306 = vmatpush1.msra.mxu0 0.0
  %307 = vmatprep.subr.mxu0 0.0
  %308 = vmatpush1.msra.mxu0 0.0
  %309 = vmatprep.subr.mxu0 0.0
  %310 = vmatpush1.msra.mxu0 0.0
  %311 = vmatprep.subr.mxu0 0.0
  %312 = vmatpush1.msra.mxu0 0.0
  %313 = vmatprep.subr.mxu0 0.0
  %314 = vmatpush1.msra.mxu0 0.0
  %315 = vmatprep.subr.mxu0 0.0
  %316 = vmatpush1.msra.mxu0 0.0
  %317 = vmatprep.subr.mxu0 0.0
  %318 = vmatpush1.msra.mxu0 0.0
  %319 = vmatprep.subr.mxu0 0.0
  %320 = vmatpush1.msra.mxu0 0.0
  %321 = vmatprep.subr.mxu0 0.0
  %322 = vmatpush1.msra.mxu0 0.0
  %323 = vmatprep.subr.mxu0 0.0
  %324 = vmatpush1.msra.mxu0 0.0
  %325 = vmatprep.subr.mxu0 0.0
  %326 = vmatpush1.msra.mxu0 0.0
  %327 = vmatprep.mubr.f32.mxu0 0.0
  %328 = vmatmul.mubr.f32.gmra.mrb[0].mxu0 %v252
  %v329 = vpop.f32.mrb[0].mxu0
  %v330 = vadd.f32 %v233, %v329
  %v331 = vpop.f32.mrb[0].mxu0
  %332 = vmatprep.mubr.f32.mxu0 0.0
  %333 = vmatmul.mubr.f32.gmra.mrb[0].mxu0 %v255
  %v334 = vpop.f32.mrb[0].mxu0
  %v335 = vadd.f32 %v238, %v334
  %v336 = vpop.f32.mrb[0].mxu0
  %337 = vmatprep.mubr.f32.mxu0 0.0
  %338 = vmatmul.mubr.f32.gmra.mrb[0].mxu0 %v258
  %v339 = vpop.f32.mrb[0].mxu0
  %v340 = vadd.f32 %v243, %v339
  %v341 = vpop.f32.mrb[0].mxu0
  %342 = vmatprep.mubr.f32.mxu0 0.0
  %343 = vmatmul.mubr.f32.gmra.mrb[0].mxu0 %v261
  %v344 = vpop.f32.mrb[0].mxu0
  %v345 = vadd.f32 %v248, %v344
  %v346 = vpop.f32.mrb[0].mxu0
  %347 = vdwg.mxu0
  %v348 = vtanh.pop %v330
  %v349 = vtanh.pop %v335
  %v350 = vtanh.pop %v340
  %v351 = vtanh.pop %v345
  %v352 = vld [vmem:[%s5] sm:$0xff]
  %v353 = vld [vmem:[%s5 + $0x8] sm:$0xff]
  %v354 = vld [vmem:[%s5 + $0x10] sm:$0xff]
  %v355 = vld [vmem:[%s5 + $0x18] sm:$0xff]
  %357 = vset.pattern.permute.xlu0 0
  %358 = vperm.xlu0 %357, %v352
  %v359 = vpop.permute.xlu0 %358
  %362 = vset.pattern.permute.xlu0 0
  %363 = vperm.xlu0 %362, %v353
  %v364 = vpop.permute.xlu0 %363
  %367 = vset.pattern.permute.xlu0 0
  %368 = vperm.xlu0 %367, %v354
  %v369 = vpop.permute.xlu0 %368
  %372 = vset.pattern.permute.xlu0 0
  %373 = vperm.xlu0 %372, %v355
  %v374 = vpop.permute.xlu0 %373
  %v376 = vmul.f32 %v348, %v359
  %v377 = vmul.f32 %v349, %v364
  %v378 = vmul.f32 %v350, %v369
  %v379 = vmul.f32 %v351, %v374
  %v380 = vadd.f32 %v376, %v377
  %v381 = vadd.f32 %v380, %v378
  %v382 = vadd.f32 %v381, %v379
  %v383 = vrot.slane %v382, 4
  %v384 = vadd.f32 %v382, %v383
  %v385 = vrot.slane %v384, 2
  %v386 = vadd.f32 %v384, %v385
  %v387 = vrot.slane %v386, 1
  %v388 = vadd.f32 %v386, %v387
  %v389 = vld [vmem:[#allocation2] sm:$0x1]
  %391 = vset.pattern.permute.xlu0 0
  %392 = vperm.xlu0 %391, %v389
  %v393 = vpop.permute.xlu0 %392
  %v395 = vlaneseq
  %v396 = vshrl.u32 %v395, 7
  %v397 = vsub.s32 0, %v396
  %v398 = vrot.slane %v393, %v397
  %v399 = vadd.f32 %v388, %v398
  %400 = vst [vmem:[%s7] sm:$0x1] %v399
  // Predicated region
  $region30: #{_value_net_forward_impl.1} parent=0 // pred_check
    _
  $region31: #{_value_net_forward_impl.1} parent=0 // pred_check_branch
    %402 = sbr.rel (0) target = $region33
  $region32: #{_value_net_forward_impl.1} parent=0 // pred_region
    _
  $region33: #{_value_net_forward_impl.1} parent=0 // pred_fallthru
    _
  // Predicated region
  $region34: #{_value_net_forward_impl.1} parent=0 // pred_check
    _
  $region35: #{_value_net_forward_impl.1} parent=0 // pred_check_branch
    %404 = sbr.rel (0) target = $region37
  $region36: #{_value_net_forward_impl.1} parent=0 // pred_region
    _
  $region37: #{_value_net_forward_impl.1} parent=0 // pred_fallthru
    _

// kernel: _value_net_forward_impl.1
$region0: #{_value_net_forward_impl.1}
  #allocation0 [shape = 'u32[]', space=smem, size = 0x4, offset = 0x4, fixed_abs, tag = 'smem constant byte address 0x4 - core index']
  #allocation1 [shape = 'u32[144,128]{1,0:T(1,128)}', space=vmem, size = 0x12000, scoped, tag = 'internal scratch']
  #allocation2 [shape = 'f32[1,1]{1,0:T(1,128)S(1)}', space=vmem, size = 0x200, scoped, tag = 'scoped memory for _value_net_forward_impl.1']
  %s0 = inlined_call_operand.vmem [shape: f32[8,16], index: 0, kind: input, shape index: {}]
  %s1 = inlined_call_operand.vmem [shape: f32[32,8], index: 1, kind: input, shape index: {}]
  %s2 = inlined_call_operand.vmem [shape: f32[32,1], index: 2, kind: input, shape index: {}]
  %s3 = inlined_call_operand.vmem [shape: f32[32,32], index: 3, kind: input, shape index: {}]
  %s4 = inlined_call_operand.vmem [shape: f32[32,1], index: 4, kind: input, shape index: {}]
  %s5 = inlined_call_operand.vmem [shape: f32[32,1], index: 5, kind: input, shape index: {}]
  %s6 = inlined_call_operand.<no memory space> [shape: f32[1,1], index: 6, kind: input, shape index: {}]
  %s7 = inlined_call_operand.vmem [shape: f32[1,16], index: 7, kind: output, shape index: {}]
  %s8 = sld [smem:[#allocation0]]
  $region38: #{_value_net_forward_impl.1} parent=0
    _
  %s10 = ssub.s32 1, %s8
  %s11 = scalar_select 0, %s10, %s8
  %v12 = vstv %s6
  %13 = vst [vmem:[#allocation2] sm:$0x1] %v12
  // Predicated region
  $region2: #{_value_net_forward_impl.1} parent=0 // pred_check
    _
  $region3: #{_value_net_forward_impl.1} parent=0 // pred_check_branch
    %15 = sbr.rel (0) target = $region5
  $region4: #{_value_net_forward_impl.1} parent=0 // pred_region
    _
  $region5: #{_value_net_forward_impl.1} parent=0 // pred_fallthru
    _
  // Predicated region
  $region6: #{_value_net_forward_impl.1} parent=0 // pred_check
    _
  $region7: #{_value_net_forward_impl.1} parent=0 // pred_check_branch
    %17 = sbr.rel (0) target = $region9
  $region8: #{_value_net_forward_impl.1} parent=0 // pred_region
    _
  $region9: #{_value_net_forward_impl.1} parent=0 // pred_fallthru
    _
  // Predicated region
  $region10: #{_value_net_forward_impl.1} parent=0 // pred_check
    _
  $region11: #{_value_net_forward_impl.1} parent=0 // pred_check_branch
    %19 = sbr.rel (0) target = $region13
  $region12: #{_value_net_forward_impl.1} parent=0 // pred_region
    _
  $region13: #{_value_net_forward_impl.1} parent=0 // pred_fallthru
    _
  // Predicated region
  $region14: #{_value_net_forward_impl.1} parent=0 // pred_check
    _
  $region15: #{_value_net_forward_impl.1} parent=0 // pred_check_branch
    %21 = sbr.rel (0) target = $region17
  $region16: #{_value_net_forward_impl.1} parent=0 // pred_region
    _
  $region17: #{_value_net_forward_impl.1} parent=0 // pred_fallthru
    _
  // Predicated region
  $region18: #{_value_net_forward_impl.1} parent=0 // pred_check
    _
  $region19: #{_value_net_forward_impl.1} parent=0 // pred_check_branch
    %23 = sbr.rel (0) target = $region21
  $region20: #{_value_net_forward_impl.1} parent=0 // pred_region
    _
  $region21: #{_value_net_forward_impl.1} parent=0 // pred_fallthru
    _
  // Predicated region
  $region22: #{_value_net_forward_impl.1} parent=0 // pred_check
    _
  $region23: #{_value_net_forward_impl.1} parent=0 // pred_check_branch
    %25 = sbr.rel (0) target = $region25
  $region24: #{_value_net_forward_impl.1} parent=0 // pred_region
    _
  $region25: #{_value_net_forward_impl.1} parent=0 // pred_fallthru
    _
  // Predicated region
  $region26: #{_value_net_forward_impl.1} parent=0 // pred_check
    _
  $region27: #{_value_net_forward_impl.1} parent=0 // pred_check_branch
    %27 = sbr.rel (0) target = $region29
  $region28: #{_value_net_forward_impl.1} parent=0 // pred_region
    _
  $region29: #{_value_net_forward_impl.1} parent=0 // pred_fallthru
    _
  %v28 = vld [vmem:[%s1] sm:$0xff]
  %v29 = vld [vmem:[%s1 + $0x8] sm:$0xff]
  %v30 = vld [vmem:[%s1 + $0x10] sm:$0xff]
  %v31 = vld [vmem:[%s1 + $0x18] sm:$0xff]
  %v32 = vld [vmem:[%s0] sm:$0xff]
  %v33 = vld [vmem:[%s2] sm:$0xff]
  %v34 = vld [vmem:[%s2 + $0x8] sm:$0xff]
  %v35 = vld [vmem:[%s2 + $0x10] sm:$0xff]
  %v36 = vld [vmem:[%s2 + $0x18] sm:$0xff]
  %38 = vset.pattern.permute.xlu0 0
  %39 = vperm.xlu0 %38, %v33
  %v40 = vpop.permute.xlu0 %39
  %43 = vset.pattern.permute.xlu0 0
  %44 = vperm.xlu0 %43, %v34
  %v45 = vpop.permute.xlu0 %44
  %48 = vset.pattern.permute.xlu0 0
  %49 = vperm.xlu0 %48, %v35
  %v50 = vpop.permute.xlu0 %49
  %53 = vset.pattern.permute.xlu0 0
  %54 = vperm.xlu0 %53, %v36
  %v55 = vpop.permute.xlu0 %54
  %vm57 = vcmask 64512
  %v59 = vsel %vm57, %v28, 0
  %v62 = vsel %vm57, %v29, 0
  %v65 = vsel %vm57, %v30, 0
  %v68 = vsel %vm57, %v31, 0
  %70 = vmatprep.subr.mxu0 0.0
  %71 = vmatpush1.msra.mxu0 %v32
  %72 = vmatprep.subr.mxu0 0.0
  %73 = vmatpush1.msra.mxu0 0.0
  %74 = vmatprep.subr.mxu0 0.0
  %75 = vmatpush1.msra.mxu0 0.0
  %76 = vmatprep.subr.mxu0 0.0
  %77 = vmatpush1.msra.mxu0 0.0
  %78 = vmatprep.subr.mxu0 0.0
  %79 = vmatpush1.msra.mxu0 0.0
  %80 = vmatprep.subr.mxu0 0.0
  %81 = vmatpush1.msra.mxu0 0.0
  %82 = vmatprep.subr.mxu0 0.0
  %83 = vmatpush1.msra.mxu0 0.0
  %84 = vmatprep.subr.mxu0 0.0
  %85 = vmatpush1.msra.mxu0 0.0
  %86 = vmatprep.subr.mxu0 0.0
  %87 = vmatpush1.msra.mxu0 0.0
  %88 = vmatprep.subr.mxu0 0.0
  %89 = vmatpush1.msra.mxu0 0.0
  %90 = vmatprep.subr.mxu0 0.0
  %91 = vmatpush1.msra.mxu0 0.0
  %92 = vmatprep.subr.mxu0 0.0
  %93 = vmatpush1.msra.mxu0 0.0
  %94 = vmatprep.subr.mxu0 0.0
  %95 = vmatpush1.msra.mxu0 0.0
  %96 = vmatprep.subr.mxu0 0.0
  %97 = vmatpush1.msra.mxu0 0.0
  %98 = vmatprep.subr.mxu0 0.0
  %99 = vmatpush1.msra.mxu0 0.0
  %100 = vmatprep.subr.mxu0 0.0
  %101 = vmatpush1.msra.mxu0 0.0
  %102 = vmatprep.subr.mxu0 0.0
  %103 = vmatpush1.msra.mxu0 0.0
  %104 = vmatprep.subr.mxu0 0.0
  %105 = vmatpush1.msra.mxu0 0.0
  %106 = vmatprep.subr.mxu0 0.0
  %107 = vmatpush1.msra.mxu0 0.0
  %108 = vmatprep.subr.mxu0 0.0
  %109 = vmatpush1.msra.mxu0 0.0
  %110 = vmatprep.subr.mxu0 0.0
  %111 = vmatpush1.msra.mxu0 0.0
  %112 = vmatprep.subr.mxu0 0.0
  %113 = vmatpush1.msra.mxu0 0.0
  %114 = vmatprep.subr.mxu0 0.0
  %115 = vmatpush1.msra.mxu0 0.0
  %116 = vmatprep.subr.mxu0 0.0
  %117 = vmatpush1.msra.mxu0 0.0
  %118 = vmatprep.subr.mxu0 0.0
  %119 = vmatpush1.msra.mxu0 0.0
  %120 = vmatprep.subr.mxu0 0.0
  %121 = vmatpush1.msra.mxu0 0.0
  %122 = vmatprep.subr.mxu0 0.0
  %123 = vmatpush1.msra.mxu0 0.0
  %124 = vmatprep.subr.mxu0 0.0
  %125 = vmatpush1.msra.mxu0 0.0
  %126 = vmatprep.subr.mxu0 0.0
  %127 = vmatpush1.msra.mxu0 0.0
  %128 = vmatprep.subr.mxu0 0.0
  %129 = vmatpush1.msra.mxu0 0.0
  %130 = vmatprep.subr.mxu0 0.0
  %131 = vmatpush1.msra.mxu0 0.0
  %132 = vmatprep.subr.mxu0 0.0
  %133 = vmatpush1.msra.mxu0 0.0
  %134 = vmatprep.mubr.f32.mxu0 0.0
  %135 = vmatmul.mubr.f32.gmra.mrb[0].mxu0 %v59
  %v136 = vpop.f32.mrb[0].mxu0
  %v137 = vadd.f32 %v40, %v136
  %v138 = vpop.f32.mrb[0].mxu0
  %139 = vmatprep.mubr.f32.mxu0 0.0
  %140 = vmatmul.mubr.f32.gmra.mrb[0].mxu0 %v62
  %v141 = vpop.f32.mrb[0].mxu0
  %v142 = vadd.f32 %v45, %v141
  %v143 = vpop.f32.mrb[0].mxu0
  %144 = vmatprep.mubr.f32.mxu0 0.0
  %145 = vmatmul.mubr.f32.gmra.mrb[0].mxu0 %v65
  %v146 = vpop.f32.mrb[0].mxu0
  %v147 = vadd.f32 %v50, %v146
  %v148 = vpop.f32.mrb[0].mxu0
  %149 = vmatprep.mubr.f32.mxu0 0.0
  %150 = vmatmul.mubr.f32.gmra.mrb[0].mxu0 %v68
  %v151 = vpop.f32.mrb[0].mxu0
  %v152 = vadd.f32 %v55, %v151
  %v153 = vpop.f32.mrb[0].mxu0
  %154 = vdwg.mxu0
  %v155 = vtanh.pop %v137
  %v156 = vtanh.pop %v142
  %v157 = vtanh.pop %v147
  %v158 = vtanh.pop %v152
  %v159 = vld [vmem:[%s3] sm:$0xff]
  %v160 = vld [vmem:[%s3 + $0x8] sm:$0xff]
  %v161 = vld [vmem:[%s3 + $0x10] sm:$0xff]
  %v162 = vld [vmem:[%s3 + $0x18] sm:$0xff]
  %v163 = vld [vmem:[%s4] sm:$0xff]
  %v164 = vld [vmem:[%s4 + $0x8] sm:$0xff]
  %v165 = vld [vmem:[%s4 + $0x10] sm:$0xff]
  %v166 = vld [vmem:[%s4 + $0x18] sm:$0xff]
  %168 = vset.pattern.permute.xlu0 0
  %169 = vperm.xlu0 %168, %v163
  %v170 = vpop.permute.xlu0 %169
  %173 = vset.pattern.permute.xlu0 0
  %174 = vperm.xlu0 %173, %v164
  %v175 = vpop.permute.xlu0 %174
  %178 = vset.pattern.permute.xlu0 0
  %179 = vperm.xlu0 %178, %v165
  %v180 = vpop.permute.xlu0 %179
  %183 = vset.pattern.permute.xlu0 0
  %184 = vperm.xlu0 %183, %v166
  %v185 = vpop.permute.xlu0 %184
  %vm187 = vcmask 261120
  %v189 = vsel %vm187, %v159, 0
  %v192 = vsel %vm187, %v160, 0
  %v195 = vsel %vm187, %v161, 0
  %v198 = vsel %vm187, %v162, 0
  %200 = vmatprep.subr.mxu0 0.0
  %201 = vmatpush1.msra.mxu0 %v155
  %202 = vmatprep.subr.mxu0 0.0
  %203 = vmatpush1.msra.mxu0 %v156
  %204 = vmatprep.subr.mxu0 0.0
  %205 = vmatpush1.msra.mxu0 %v157
  %206 = vmatprep.subr.mxu0 0.0
  %207 = vmatpush1.msra.mxu0 %v158
  %208 = vmatprep.subr.mxu0 0.0
  %209 = vmatpush1.msra.mxu0 0.0
  %210 = vmatprep.subr.mxu0 0.0
  %211 = vmatpush1.msra.mxu0 0.0
  %212 = vmatprep.subr.mxu0 0.0
  %213 = vmatpush1.msra.mxu0 0.0
  %214 = vmatprep.subr.mxu0 0.0
  %215 = vmatpush1.msra.mxu0 0.0
  %216 = vmatprep.subr.mxu0 0.0
  %217 = vmatpush1.msra.mxu0 0.0
  %218 = vmatprep.subr.mxu0 0.0
  %219 = vmatpush1.msra.mxu0 0.0
  %220 = vmatprep.subr.mxu0 0.0
  %221 = vmatpush1.msra.mxu0 0.0
  %222 = vmatprep.subr.mxu0 0.0
  %223 = vmatpush1.msra.mxu0 0.0
  %224 = vmatprep.subr.mxu0 0.0
  %225 = vmatpush1.msra.mxu0 0.0
  %226 = vmatprep.subr.mxu0 0.0
  %227 = vmatpush1.msra.mxu0 0.0
  %228 = vmatprep.subr.mxu0 0.0
  %229 = vmatpush1.msra.mxu0 0.0
  %230 = vmatprep.subr.mxu0 0.0
  %231 = vmatpush1.msra.mxu0 0.0
  %232 = vmatprep.subr.mxu0 0.0
  %233 = vmatpush1.msra.mxu0 0.0
  %234 = vmatprep.subr.mxu0 0.0
  %235 = vmatpush1.msra.mxu0 0.0
  %236 = vmatprep.subr.mxu0 0.0
  %237 = vmatpush1.msra.mxu0 0.0
  %238 = vmatprep.subr.mxu0 0.0
  %239 = vmatpush1.msra.mxu0 0.0
  %240 = vmatprep.subr.mxu0 0.0
  %241 = vmatpush1.msra.mxu0 0.0
  %242 = vmatprep.subr.mxu0 0.0
  %243 = vmatpush1.msra.mxu0 0.0
  %244 = vmatprep.subr.mxu0 0.0
  %245 = vmatpush1.msra.mxu0 0.0
  %246 = vmatprep.subr.mxu0 0.0
  %247 = vmatpush1.msra.mxu0 0.0
  %248 = vmatprep.subr.mxu0 0.0
  %249 = vmatpush1.msra.mxu0 0.0
  %250 = vmatprep.subr.mxu0 0.0
  %251 = vmatpush1.msra.mxu0 0.0
  %252 = vmatprep.subr.mxu0 0.0
  %253 = vmatpush1.msra.mxu0 0.0
  %254 = vmatprep.subr.mxu0 0.0
  %255 = vmatpush1.msra.mxu0 0.0
  %256 = vmatprep.subr.mxu0 0.0
  %257 = vmatpush1.msra.mxu0 0.0
  %258 = vmatprep.subr.mxu0 0.0
  %259 = vmatpush1.msra.mxu0 0.0
  %260 = vmatprep.subr.mxu0 0.0
  %261 = vmatpush1.msra.mxu0 0.0
  %262 = vmatprep.subr.mxu0 0.0
  %263 = vmatpush1.msra.mxu0 0.0
  %264 = vmatprep.mubr.f32.mxu0 0.0
  %265 = vmatmul.mubr.f32.gmra.mrb[0].mxu0 %v189
  %v266 = vpop.f32.mrb[0].mxu0
  %v267 = vadd.f32 %v170, %v266
  %v268 = vpop.f32.mrb[0].mxu0
  %269 = vmatprep.mubr.f32.mxu0 0.0
  %270 = vmatmul.mubr.f32.gmra.mrb[0].mxu0 %v192
  %v271 = vpop.f32.mrb[0].mxu0
  %v272 = vadd.f32 %v175, %v271
  %v273 = vpop.f32.mrb[0].mxu0
  %274 = vmatprep.mubr.f32.mxu0 0.0
  %275 = vmatmul.mubr.f32.gmra.mrb[0].mxu0 %v195
  %v276 = vpop.f32.mrb[0].mxu0
  %v277 = vadd.f32 %v180, %v276
  %v278 = vpop.f32.mrb[0].mxu0
  %279 = vmatprep.mubr.f32.mxu0 0.0
  %280 = vmatmul.mubr.f32.gmra.mrb[0].mxu0 %v198
  %v281 = vpop.f32.mrb[0].mxu0
  %v282 = vadd.f32 %v185, %v281
  %v283 = vpop.f32.mrb[0].mxu0
  %284 = vdwg.mxu0
  %v285 = vtanh.pop %v267
  %v286 = vtanh.pop %v272
  %v287 = vtanh.pop %v277
  %v288 = vtanh.pop %v282
  %v289 = vld [vmem:[%s5] sm:$0xff]
  %v290 = vld [vmem:[%s5 + $0x8] sm:$0xff]
  %v291 = vld [vmem:[%s5 + $0x10] sm:$0xff]
  %v292 = vld [vmem:[%s5 + $0x18] sm:$0xff]
  %294 = vset.pattern.permute.xlu0 0
  %295 = vperm.xlu0 %294, %v289
  %v296 = vpop.permute.xlu0 %295
  %299 = vset.pattern.permute.xlu0 0
  %300 = vperm.xlu0 %299, %v290
  %v301 = vpop.permute.xlu0 %300
  %304 = vset.pattern.permute.xlu0 0
  %305 = vperm.xlu0 %304, %v291
  %v306 = vpop.permute.xlu0 %305
  %309 = vset.pattern.permute.xlu0 0
  %310 = vperm.xlu0 %309, %v292
  %v311 = vpop.permute.xlu0 %310
  %v313 = vmul.f32 %v285, %v296
  %v314 = vmul.f32 %v286, %v301
  %v315 = vmul.f32 %v287, %v306
  %v316 = vmul.f32 %v288, %v311
  %v317 = vadd.f32 %v313, %v314
  %v318 = vadd.f32 %v317, %v315
  %v319 = vadd.f32 %v318, %v316
  %v320 = vrot.slane %v319, 4
  %v321 = vadd.f32 %v319, %v320
  %v322 = vrot.slane %v321, 2
  %v323 = vadd.f32 %v321, %v322
  %v324 = vrot.slane %v323, 1
  %v325 = vadd.f32 %v323, %v324
  %v326 = vld [vmem:[#allocation2] sm:$0x1]
  %328 = vset.pattern.permute.xlu0 0
  %329 = vperm.xlu0 %328, %v326
  %v330 = vpop.permute.xlu0 %329
  %v332 = vlaneseq
  %v333 = vshrl.u32 %v332, 7
  %v334 = vsub.s32 0, %v333
  %v335 = vrot.slane %v330, %v334
  %v336 = vadd.f32 %v325, %v335
  %337 = vst [vmem:[%s7] sm:$0x1] %v336
  // Predicated region
  $region30: #{_value_net_forward_impl.1} parent=0 // pred_check
    _
  $region31: #{_value_net_forward_impl.1} parent=0 // pred_check_branch
    %339 = sbr.rel (0) target = $region33
  $region32: #{_value_net_forward_impl.1} parent=0 // pred_region
    _
  $region33: #{_value_net_forward_impl.1} parent=0 // pred_fallthru
    _
  // Predicated region
  $region34: #{_value_net_forward_impl.1} parent=0 // pred_check
    _
  $region35: #{_value_net_forward_impl.1} parent=0 // pred_check_branch
    %341 = sbr.rel (0) target = $region37
  $region36: #{_value_net_forward_impl.1} parent=0 // pred_region
    _
  $region37: #{_value_net_forward_impl.1} parent=0 // pred_fallthru
    _

</llo_original>
